<compile_context>
chip_gen: v7x
topology: tpu7x:2x2x1
jax: 0.10.0
libtpu: 0.0.40
codegen_flags: <defaults>
</compile_context>

<pallas_src>
import jax
import jax.numpy as jnp
from jax.experimental import pallas as pl
from jax.experimental.pallas import tpu as pltpu

D = 2     # feature dim of x1 == out_features of linear1/2/3
TB = 128  # lane tile over the batch axis


def _model_kernel(p_ref, x_ref, o_ref):
    # p_ref: SMEM f32[18]  -- [W1(4), b1(2), W2(4), b2(2), W3(4), b3(2)], W row-major
    # x_ref: VMEM (D, TB)  -- x[b, 0, :] transposed; batch on the lane axis
    # o_ref: VMEM (D*D, TB) -- row r = i*D + j of the (B, D, D) output, batch on lanes
    X = x_ref[...]                       # (2, TB)
    x0 = X[0:1, :]                       # (1, TB)  feature 0 of x1
    x1r = X[1:2, :]                      # (1, TB)  feature 1 of x1

    def lin(z0, z1, base):
        # out[j] = W[j,0]*z0 + W[j,1]*z1 + b[j]   (scalar * vector on the VPU)
        o0 = p_ref[base + 0] * z0 + p_ref[base + 1] * z1 + p_ref[base + 4]
        o1 = p_ref[base + 2] * z0 + p_ref[base + 3] * z1 + p_ref[base + 5]
        return o0, o1                    # each (1, TB)

    v0_0, v0_1 = lin(x0, x1r, 0)         # linear1(x1)
    v1_0, v1_1 = lin(x0, x1r, 6)         # linear2(x1)

    # Row i of the broadcast chain uses v1[:, i] (v2 = v1.permute(0, 2, 1)).
    v1_rows = (v1_0, v1_1)
    for i in range(D):                   # static unroll over the permuted dim
        v4_i0 = v0_0 + x0 - v1_rows[i]   # v4[b, i, 0]
        v4_i1 = v0_1 + x1r - v1_rows[i]  # v4[b, i, 1]
        v5_i0, v5_i1 = lin(v4_i0, v4_i1, 12)       # linear3 on row i
        o_ref[i * D + 0:i * D + 1, :] = x0 + v5_i0   # v6[b, i, 0]
        o_ref[i * D + 1:i * D + 2, :] = x1r + v5_i1  # v6[b, i, 1]


def pack_params(w1, b1, w2, b2, w3, b3):
    """One-time pack of all Linear params into a flat 1-D f32[18] (SMEM-friendly)."""
    def blk(w, b):
        return jnp.concatenate([w.reshape(-1), b.reshape(-1)]).astype(jnp.float32)
    return jnp.concatenate([blk(w1, b1), blk(w2, b2), blk(w3, b3)])   # (18,)


def model_forward(x, packed_params):
    B, S, Din = x.shape
    assert S == 1, "forward() broadcast chain requires seq dim == 1"
    assert Din == D, "kernel is specialized to D == 2 (matches the module)"

    xt = jnp.transpose(x[:, 0, :], (1, 0))            # (D, B): batch on lane axis
    b_pad = ((B + TB - 1) // TB) * TB
    if b_pad != B:
        xt = jnp.pad(xt, ((0, 0), (0, b_pad - B)))

    out_flat = pl.pallas_call(
        _model_kernel,
        out_shape=jax.ShapeDtypeStruct((D * D, b_pad), jnp.float32),
        grid=(b_pad // TB,),
        in_specs=[
            pl.BlockSpec(memory_space=pltpu.MemorySpace.SMEM),      # flat params, whole array
            pl.BlockSpec((D, TB), lambda i: (0, i)),                # x tile (lane-dense)
        ],
        out_specs=pl.BlockSpec((D * D, TB), lambda i: (0, i)),      # lane-dense output tile
        compiler_params=pltpu.CompilerParams(dimension_semantics=("parallel",)),
    )(packed_params, xt)

    # (D*D, B_pad) -> (B, D, D): column b, row i*D + j
    return jnp.transpose(out_flat[:, :B], (1, 0)).reshape(B, D, D)


def _reference(x, w1, b1, w2, b2, w3, b3):
    # plain-JAX reference of the same (fixed-up) forward pass
    v0 = x @ w1.T + b1                        # (B, 1, 2)
    v1 = x @ w2.T + b2                        # (B, 1, 2)
    v2 = jnp.transpose(v1, (0, 2, 1))         # (B, 2, 1)
    v3 = x - v2                               # (B, 2, 2)
    v4 = v0 + v3                              # (B, 2, 2)
    v5 = v4 @ w3.T + b3                       # (B, 2, 2)
    v6 = x + v5                               # (B, 2, 2)
    return v6


if __name__ == "__main__":
    key = jax.random.PRNGKey(0)
    k_x, k_xb, k1w, k1b, k2w, k2b, k3w, k3b = jax.random.split(key, 8)

    # Parameters (shapes per nn.Linear, with linear1 widened to in_features=2).
    w1 = jax.random.normal(k1w, (2, D), dtype=jnp.float32) * 0.5
    b1 = jax.random.normal(k1b, (2,), dtype=jnp.float32) * 0.1
    w2 = jax.random.normal(k2w, (2, D), dtype=jnp.float32) * 0.5
    b2 = jax.random.normal(k2b, (2,), dtype=jnp.float32) * 0.1
    w3 = jax.random.normal(k3w, (2, D), dtype=jnp.float32) * 0.5
    b3 = jax.random.normal(k3b, (2,), dtype=jnp.float32) * 0.1

    packed = jax.block_until_ready(pack_params(w1, b1, w2, b2, w3, b3))  # one-time pack

    # Spec shape: x1 ~ randn(1, 1, 2)
    x = jax.random.normal(k_x, (1, 1, D), dtype=jnp.float32)
    out = jax.block_until_ready(model_forward(x, packed))
    ref = _reference(x, w1, b1, w2, b2, w3, b3)
    assert out.shape == (1, D, D), out.shape
    assert jnp.allclose(out, ref, atol=1e-5, rtol=1e-5), (out, ref)

    # Small B > 1 sanity check (exercises batched/padded lane layout).
    xb = jax.random.normal(k_xb, (5, 1, D), dtype=jnp.float32)
    outb = jax.block_until_ready(model_forward(xb, packed))
    refb = _reference(xb, w1, b1, w2, b2, w3, b3)
    assert outb.shape == (5, D, D), outb.shape
    assert jnp.allclose(outb, refb, atol=1e-5, rtol=1e-5), (outb, refb)

    print("KERNEL_OK")
</pallas_src>

<mosaic_0001>
module attributes {stable_mosaic.version = 11 : i64} {
  func.func @_model_kernel(%arg0: i32, %arg1: memref<18xf32, #tpu.memory_space<smem>>, %arg2: memref<2x128xf32, #tpu.memory_space<vmem>>, %arg3: memref<4x128xf32, #tpu.memory_space<vmem>>) attributes {dimension_semantics = [#tpu.dimension_semantics<parallel>], iteration_bounds = array<i64: 1>, scalar_prefetch = 0 : i64, scratch_operands = 0 : i64, tpu.core_type = #tpu.core_type<tc>, window_params = [{transform_indices = @transform_0, window_bounds = array<i64: 18>}, {transform_indices = @transform_1, window_bounds = array<i64: 2, 128>}, {transform_indices = @transform_2, window_bounds = array<i64: 4, 128>}]} {
    %c0 = arith.constant 0 : index
    %c0_0 = arith.constant 0 : index
    %0 = vector.load %arg2[%c0, %c0_0] : memref<2x128xf32, #tpu.memory_space<vmem>>, vector<2x128xf32>
    %1 = vector.extract_strided_slice %0 {offsets = [0, 0], sizes = [1, 128], strides = [1, 1]} : vector<2x128xf32> to vector<1x128xf32>
    %2 = vector.extract_strided_slice %0 {offsets = [1, 0], sizes = [1, 128], strides = [1, 1]} : vector<2x128xf32> to vector<1x128xf32>
    %c0_1 = arith.constant 0 : index
    %3 = memref.load %arg1[%c0_1] : memref<18xf32, #tpu.memory_space<smem>>
    %4 = vector.broadcast %3 : f32 to vector<1x128xf32>
    %5 = arith.mulf %4, %1 : vector<1x128xf32>
    %c1 = arith.constant 1 : index
    %6 = memref.load %arg1[%c1] : memref<18xf32, #tpu.memory_space<smem>>
    %7 = vector.broadcast %6 : f32 to vector<1x128xf32>
    %8 = arith.mulf %7, %2 : vector<1x128xf32>
    %9 = arith.addf %5, %8 : vector<1x128xf32>
    %c4 = arith.constant 4 : index
    %10 = memref.load %arg1[%c4] : memref<18xf32, #tpu.memory_space<smem>>
    %11 = vector.broadcast %10 : f32 to vector<1x128xf32>
    %12 = arith.addf %9, %11 : vector<1x128xf32>
    %c2 = arith.constant 2 : index
    %13 = memref.load %arg1[%c2] : memref<18xf32, #tpu.memory_space<smem>>
    %14 = vector.broadcast %13 : f32 to vector<1x128xf32>
    %15 = arith.mulf %14, %1 : vector<1x128xf32>
    %c3 = arith.constant 3 : index
    %16 = memref.load %arg1[%c3] : memref<18xf32, #tpu.memory_space<smem>>
    %17 = vector.broadcast %16 : f32 to vector<1x128xf32>
    %18 = arith.mulf %17, %2 : vector<1x128xf32>
    %19 = arith.addf %15, %18 : vector<1x128xf32>
    %c5 = arith.constant 5 : index
    %20 = memref.load %arg1[%c5] : memref<18xf32, #tpu.memory_space<smem>>
    %21 = vector.broadcast %20 : f32 to vector<1x128xf32>
    %22 = arith.addf %19, %21 : vector<1x128xf32>
    %c6 = arith.constant 6 : index
    %23 = memref.load %arg1[%c6] : memref<18xf32, #tpu.memory_space<smem>>
    %24 = vector.broadcast %23 : f32 to vector<1x128xf32>
    %25 = arith.mulf %24, %1 : vector<1x128xf32>
    %c7 = arith.constant 7 : index
    %26 = memref.load %arg1[%c7] : memref<18xf32, #tpu.memory_space<smem>>
    %27 = vector.broadcast %26 : f32 to vector<1x128xf32>
    %28 = arith.mulf %27, %2 : vector<1x128xf32>
    %29 = arith.addf %25, %28 : vector<1x128xf32>
    %c10 = arith.constant 10 : index
    %30 = memref.load %arg1[%c10] : memref<18xf32, #tpu.memory_space<smem>>
    %31 = vector.broadcast %30 : f32 to vector<1x128xf32>
    %32 = arith.addf %29, %31 : vector<1x128xf32>
    %c8 = arith.constant 8 : index
    %33 = memref.load %arg1[%c8] : memref<18xf32, #tpu.memory_space<smem>>
    %34 = vector.broadcast %33 : f32 to vector<1x128xf32>
    %35 = arith.mulf %34, %1 : vector<1x128xf32>
    %c9 = arith.constant 9 : index
    %36 = memref.load %arg1[%c9] : memref<18xf32, #tpu.memory_space<smem>>
    %37 = vector.broadcast %36 : f32 to vector<1x128xf32>
    %38 = arith.mulf %37, %2 : vector<1x128xf32>
    %39 = arith.addf %35, %38 : vector<1x128xf32>
    %c11 = arith.constant 11 : index
    %40 = memref.load %arg1[%c11] : memref<18xf32, #tpu.memory_space<smem>>
    %41 = vector.broadcast %40 : f32 to vector<1x128xf32>
    %42 = arith.addf %39, %41 : vector<1x128xf32>
    %43 = arith.addf %12, %1 : vector<1x128xf32>
    %44 = arith.subf %43, %32 : vector<1x128xf32>
    %45 = arith.addf %22, %2 : vector<1x128xf32>
    %46 = arith.subf %45, %32 : vector<1x128xf32>
    %c12 = arith.constant 12 : index
    %47 = memref.load %arg1[%c12] : memref<18xf32, #tpu.memory_space<smem>>
    %48 = vector.broadcast %47 : f32 to vector<1x128xf32>
    %49 = arith.mulf %48, %44 : vector<1x128xf32>
    %c13 = arith.constant 13 : index
    %50 = memref.load %arg1[%c13] : memref<18xf32, #tpu.memory_space<smem>>
    %51 = vector.broadcast %50 : f32 to vector<1x128xf32>
    %52 = arith.mulf %51, %46 : vector<1x128xf32>
    %53 = arith.addf %49, %52 : vector<1x128xf32>
    %c16 = arith.constant 16 : index
    %54 = memref.load %arg1[%c16] : memref<18xf32, #tpu.memory_space<smem>>
    %55 = vector.broadcast %54 : f32 to vector<1x128xf32>
    %56 = arith.addf %53, %55 : vector<1x128xf32>
    %c14 = arith.constant 14 : index
    %57 = memref.load %arg1[%c14] : memref<18xf32, #tpu.memory_space<smem>>
    %58 = vector.broadcast %57 : f32 to vector<1x128xf32>
    %59 = arith.mulf %58, %44 : vector<1x128xf32>
    %c15 = arith.constant 15 : index
    %60 = memref.load %arg1[%c15] : memref<18xf32, #tpu.memory_space<smem>>
    %61 = vector.broadcast %60 : f32 to vector<1x128xf32>
    %62 = arith.mulf %61, %46 : vector<1x128xf32>
    %63 = arith.addf %59, %62 : vector<1x128xf32>
    %c17 = arith.constant 17 : index
    %64 = memref.load %arg1[%c17] : memref<18xf32, #tpu.memory_space<smem>>
    %65 = vector.broadcast %64 : f32 to vector<1x128xf32>
    %66 = arith.addf %63, %65 : vector<1x128xf32>
    %67 = arith.addf %1, %56 : vector<1x128xf32>
    %c0_2 = arith.constant 0 : index
    %c0_3 = arith.constant 0 : index
    %68 = vector.load %arg3[%c0_2, %c0_3] : memref<4x128xf32, #tpu.memory_space<vmem>>, vector<1x128xf32>
    tpu.vector_store %arg3[%c0_2, %c0_3], %67 {strides = array<i32>} : memref<4x128xf32, #tpu.memory_space<vmem>>, vector<1x128xf32>,
    %69 = arith.addf %2, %66 : vector<1x128xf32>
    %c1_4 = arith.constant 1 : index
    %c0_5 = arith.constant 0 : index
    %70 = vector.load %arg3[%c1_4, %c0_5] : memref<4x128xf32, #tpu.memory_space<vmem>>, vector<1x128xf32>
    tpu.vector_store %arg3[%c1_4, %c0_5], %69 {strides = array<i32>} : memref<4x128xf32, #tpu.memory_space<vmem>>, vector<1x128xf32>,
    %71 = arith.addf %12, %1 : vector<1x128xf32>
    %72 = arith.subf %71, %42 : vector<1x128xf32>
    %73 = arith.addf %22, %2 : vector<1x128xf32>
    %74 = arith.subf %73, %42 : vector<1x128xf32>
    %c12_6 = arith.constant 12 : index
    %75 = memref.load %arg1[%c12_6] : memref<18xf32, #tpu.memory_space<smem>>
    %76 = vector.broadcast %75 : f32 to vector<1x128xf32>
    %77 = arith.mulf %76, %72 : vector<1x128xf32>
    %c13_7 = arith.constant 13 : index
    %78 = memref.load %arg1[%c13_7] : memref<18xf32, #tpu.memory_space<smem>>
    %79 = vector.broadcast %78 : f32 to vector<1x128xf32>
    %80 = arith.mulf %79, %74 : vector<1x128xf32>
    %81 = arith.addf %77, %80 : vector<1x128xf32>
    %c16_8 = arith.constant 16 : index
    %82 = memref.load %arg1[%c16_8] : memref<18xf32, #tpu.memory_space<smem>>
    %83 = vector.broadcast %82 : f32 to vector<1x128xf32>
    %84 = arith.addf %81, %83 : vector<1x128xf32>
    %c14_9 = arith.constant 14 : index
    %85 = memref.load %arg1[%c14_9] : memref<18xf32, #tpu.memory_space<smem>>
    %86 = vector.broadcast %85 : f32 to vector<1x128xf32>
    %87 = arith.mulf %86, %72 : vector<1x128xf32>
    %c15_10 = arith.constant 15 : index
    %88 = memref.load %arg1[%c15_10] : memref<18xf32, #tpu.memory_space<smem>>
    %89 = vector.broadcast %88 : f32 to vector<1x128xf32>
    %90 = arith.mulf %89, %74 : vector<1x128xf32>
    %91 = arith.addf %87, %90 : vector<1x128xf32>
    %c17_11 = arith.constant 17 : index
    %92 = memref.load %arg1[%c17_11] : memref<18xf32, #tpu.memory_space<smem>>
    %93 = vector.broadcast %92 : f32 to vector<1x128xf32>
    %94 = arith.addf %91, %93 : vector<1x128xf32>
    %95 = arith.addf %1, %84 : vector<1x128xf32>
    %c2_12 = arith.constant 2 : index
    %c0_13 = arith.constant 0 : index
    %96 = vector.load %arg3[%c2_12, %c0_13] : memref<4x128xf32, #tpu.memory_space<vmem>>, vector<1x128xf32>
    tpu.vector_store %arg3[%c2_12, %c0_13], %95 {strides = array<i32>} : memref<4x128xf32, #tpu.memory_space<vmem>>, vector<1x128xf32>,
    %97 = arith.addf %2, %94 : vector<1x128xf32>
    %c3_14 = arith.constant 3 : index
    %c0_15 = arith.constant 0 : index
    %98 = vector.load %arg3[%c3_14, %c0_15] : memref<4x128xf32, #tpu.memory_space<vmem>>, vector<1x128xf32>
    tpu.vector_store %arg3[%c3_14, %c0_15], %97 {strides = array<i32>} : memref<4x128xf32, #tpu.memory_space<vmem>>, vector<1x128xf32>,
    return
  }
  func.func @transform_0(%arg0: i32) -> i32 {
    %c0_i32 = arith.constant 0 : i32
    %c0_i32_0 = arith.constant 0 : i32
    return %c0_i32 : i32
  }
  func.func @transform_1(%arg0: i32) -> (i32, i32) {
    %c0_i32 = arith.constant 0 : i32
    %c0_i32_0 = arith.constant 0 : i32
    return %c0_i32, %arg0 : i32, i32
  }
  func.func @transform_2(%arg0: i32) -> (i32, i32) {
    %c0_i32 = arith.constant 0 : i32
    %c0_i32_0 = arith.constant 0 : i32
    return %c0_i32, %arg0 : i32, i32
  }
}

</mosaic_0001>

<llo_original>
// kernel: tpu_custom_call.1
$region0: #{tpu_custom_call.1}
  #allocation0 [shape = 'u32[]', space=smem, size = 0x4, offset = 0x4, fixed_abs, tag = 'smem constant byte address 0x4 - core index']
  #allocation1 [shape = 'u32[144,128]{1,0:T(1,128)}', space=vmem, size = 0x12000, scoped, tag = 'internal scratch']
  %s0 = inlined_call_operand.hbm [shape: f32[18], index: 0, kind: input, shape index: {}]
  %s1 = inlined_call_operand.vmem [shape: f32[2,128], index: 1, kind: input, shape index: {}]
  %s2 = inlined_call_operand.hbm [shape: f32[4,128], index: 2, kind: output, shape index: {}]
  %s3 = sld [smem:[#allocation0]]
  $region22: #{tpu_custom_call.1} parent=0
    _
  %s5 = ssub.s32 1, %s3
  %s6 = scalar_select 0, %s5, %s3
  $region1: #{tpu_custom_call.1} parent=0
    #allocation2 [shape = 'u8[512]{0}', space=smem, size = 0x200, scoped, tag = 'input window, operand 0, single buffered']
    #allocation3 [shape = 's32[1]{0}', space=sflag, size = 0x4, scoped, tag = 'scoped memory for tpu_custom_call.1']
    #allocation4 [shape = 's32[1]{0}', space=sflag, size = 0x4, scoped, tag = 'scoped memory for tpu_custom_call.1']
    #allocation5 [shape = 'u8[2048]{0}', space=vmem, size = 0x800, scoped, tag = 'output window, operand 0, single buffered']
    %7 = vsyncpa [#allocation4], 0
    %8 = vsyncpa [#allocation3], 0
    // Predicated region
    $region2: #{tpu_custom_call.1} parent=1 // pred_check
      _
    $region3: #{tpu_custom_call.1} parent=1 // pred_check_branch
      %10 = sbr.rel (0) target = $region5
    $region4: #{tpu_custom_call.1} parent=1 // pred_region
      %s12 = ssub.s32 16, 16
      %13 = vsyncadd [#allocation4], %s12
      %16 = dma.hbm_to_smem %s0, 16, [#allocation2], [#allocation4]
    $region5: #{tpu_custom_call.1} parent=1 // pred_fallthru
      _
    // Predicated region
    $region6: #{tpu_custom_call.1} parent=1 // pred_check
      _
    $region7: #{tpu_custom_call.1} parent=1 // pred_check_branch
      %18 = sbr.rel (0) target = $region9
    $region8: #{tpu_custom_call.1} parent=1 // pred_region
      _
    $region9: #{tpu_custom_call.1} parent=1 // pred_fallthru
      _
    // Predicated region
    $region10: #{tpu_custom_call.1} parent=1 // pred_check
      _
    $region11: #{tpu_custom_call.1} parent=1 // pred_check_branch
      %20 = sbr.rel (0) target = $region13
    $region12: #{tpu_custom_call.1} parent=1 // pred_region
      %21 = dma.done [#allocation4], 16
    $region13: #{tpu_custom_call.1} parent=1 // pred_fallthru
      _
    %22 = sfence
    %v23 = vld [vmem:[%s1] sm:$0x3]
    %s24 = sld [smem:[#allocation2]]
    %v25 = vstv %s24
    %v26 = vmul.f32 %v25, %v23
    %s27 = sld [smem:[#allocation2 + $0x1]]
    %v28 = vstv %s27
    %v29 = vmul.f32 %v28, %v23
    %v31 = vrot.slane %v29, 1
    %v33 = vadd.f32 %v26, %v31
    %s34 = sld [smem:[#allocation2 + $0x4]]
    %v35 = vstv %s34
    %v36 = vadd.f32 %v33, %v35
    %s37 = sld [smem:[#allocation2 + $0x2]]
    %v38 = vstv %s37
    %v39 = vmul.f32 %v38, %v23
    %s40 = sld [smem:[#allocation2 + $0x3]]
    %v41 = vstv %s40
    %v42 = vmul.f32 %v41, %v23
    %v44 = vrot.slane %v42, 1
    %v46 = vadd.f32 %v39, %v44
    %s47 = sld [smem:[#allocation2 + $0x5]]
    %v48 = vstv %s47
    %v49 = vadd.f32 %v46, %v48
    %s50 = sld [smem:[#allocation2 + $0x6]]
    %v51 = vstv %s50
    %v52 = vmul.f32 %v51, %v23
    %s53 = sld [smem:[#allocation2 + $0x7]]
    %v54 = vstv %s53
    %v55 = vmul.f32 %v54, %v23
    %v57 = vrot.slane %v55, 1
    %v59 = vadd.f32 %v52, %v57
    %s60 = sld [smem:[#allocation2 + $0xa]]
    %v61 = vstv %s60
    %v62 = vadd.f32 %v59, %v61
    %s63 = sld [smem:[#allocation2 + $0x8]]
    %v64 = vstv %s63
    %v65 = vmul.f32 %v64, %v23
    %s66 = sld [smem:[#allocation2 + $0x9]]
    %v67 = vstv %s66
    %v68 = vmul.f32 %v67, %v23
    %v70 = vrot.slane %v68, 1
    %v72 = vadd.f32 %v65, %v70
    %s73 = sld [smem:[#allocation2 + $0xb]]
    %v74 = vstv %s73
    %v75 = vadd.f32 %v72, %v74
    %v76 = vadd.f32 %v36, %v23
    %v77 = vsub.f32 %v76, %v62
    %v79 = vrot.slane %v23, 1
    %v81 = vadd.f32 %v49, %v79
    %v82 = vsub.f32 %v81, %v62
    %s83 = sld [smem:[#allocation2 + $0xc]]
    %v84 = vstv %s83
    %v85 = vmul.f32 %v84, %v77
    %s86 = sld [smem:[#allocation2 + $0xd]]
    %v87 = vstv %s86
    %v88 = vmul.f32 %v87, %v82
    %v89 = vadd.f32 %v85, %v88
    %s90 = sld [smem:[#allocation2 + $0x10]]
    %v91 = vstv %s90
    %v92 = vadd.f32 %v89, %v91
    %s93 = sld [smem:[#allocation2 + $0xe]]
    %v94 = vstv %s93
    %v95 = vmul.f32 %v94, %v77
    %s96 = sld [smem:[#allocation2 + $0xf]]
    %v97 = vstv %s96
    %v98 = vmul.f32 %v97, %v82
    %v99 = vadd.f32 %v95, %v98
    %s100 = sld [smem:[#allocation2 + $0x11]]
    %v101 = vstv %s100
    %v102 = vadd.f32 %v99, %v101
    %v103 = vadd.f32 %v23, %v92
    %104 = vst [vmem:[#allocation5] sm:$0x1] %v103
    %v106 = vrot.slane %v102, 7
    %v108 = vadd.f32 %v23, %v106
    %109 = vst [vmem:[#allocation5] sm:$0x2] %v108
    %v110 = vsub.f32 %v76, %v75
    %v111 = vsub.f32 %v81, %v75
    %s112 = sld [smem:[#allocation2 + $0xc]]
    %v113 = vstv %s112
    %v114 = vmul.f32 %v113, %v110
    %s115 = sld [smem:[#allocation2 + $0xd]]
    %v116 = vstv %s115
    %v117 = vmul.f32 %v116, %v111
    %v118 = vadd.f32 %v114, %v117
    %s119 = sld [smem:[#allocation2 + $0x10]]
    %v120 = vstv %s119
    %v121 = vadd.f32 %v118, %v120
    %s122 = sld [smem:[#allocation2 + $0xe]]
    %v123 = vstv %s122
    %v124 = vmul.f32 %v123, %v110
    %s125 = sld [smem:[#allocation2 + $0xf]]
    %v126 = vstv %s125
    %v127 = vmul.f32 %v126, %v111
    %v128 = vadd.f32 %v124, %v127
    %s129 = sld [smem:[#allocation2 + $0x11]]
    %v130 = vstv %s129
    %v131 = vadd.f32 %v128, %v130
    %v132 = vadd.f32 %v23, %v121
    %133 = vst [vmem:[#allocation5 + $0x2] sm:$0x1] %v132
    %v135 = vrot.slane %v131, 7
    %v137 = vadd.f32 %v23, %v135
    %138 = vst [vmem:[#allocation5 + $0x2] sm:$0x2] %v137
    // Predicated region
    $region14: #{tpu_custom_call.1} parent=1 // pred_check
      _
    $region15: #{tpu_custom_call.1} parent=1 // pred_check_branch
      %140 = sbr.rel (0) target = $region17
    $region16: #{tpu_custom_call.1} parent=1 // pred_region
      %s142 = ssub.s32 64, 64
      %143 = vsyncadd [#allocation3], %s142
      %s145 = sshll.u32 [#allocation5], 4
      %s146 = int_to_ptr.vmem [resolvable:$true] %s145
      %148 = dma.vmem_to_hbm [thread:$0]  %s146, 64, %s2, [#allocation3]
    $region17: #{tpu_custom_call.1} parent=1 // pred_fallthru
      _
    // Predicated region
    $region18: #{tpu_custom_call.1} parent=1 // pred_check
      _
    $region19: #{tpu_custom_call.1} parent=1 // pred_check_branch
      %150 = sbr.rel (0) target = $region21
    $region20: #{tpu_custom_call.1} parent=1 // pred_region
      %151 = dma.done [#allocation3], 64
    $region21: #{tpu_custom_call.1} parent=1 // pred_fallthru
      _
    %152 = vsyncpa [#allocation3], 1
    %153 = vsyncpa [#allocation4], 1

</llo_original>
